<compile_context>
chip_gen: v7x
topology: tpu7x:2x2x1
jax: 0.10.0
libtpu: 0.0.40
codegen_flags: <defaults>
</compile_context>

<pallas_src>
import functools
import math

import jax
import jax.numpy as jnp
import numpy as np
from jax.experimental import pallas as pl
from jax.experimental.pallas import tpu as pltpu


# ----------------------------- kernel -----------------------------------------

def pe_add_kernel(x_ref, pe_ref, o_ref, *, seq_tile, batch, pe_resident):
    # x_ref : (seq_tile, B*C)
    # pe_ref: (S, C) resident slab, or (seq_tile, C) streamed tile
    if pe_resident:
        start = pl.multiple_of(pl.program_id(0) * seq_tile, seq_tile)
        pe_rows = pe_ref[pl.ds(start, seq_tile), :]          # (seq_tile, C)
    else:
        pe_rows = pe_ref[...]                                 # (seq_tile, C)
    # Broadcast across the batch packed into the lane axis: column b*C + c of x
    # needs pe[:, c], i.e. the C-vector repeated B times -> jnp.tile along lanes
    # (whole-vreg lane copies, no XLU traffic).  Dropout(eval) == identity.
    o_ref[...] = x_ref[...] + jnp.tile(pe_rows, (1, batch))


# ----------------------------- tiling helper ------------------------------------

def _choose_seq_tile(S, row_bytes, *, target_bytes=2 << 20, min_steps=2):
    """Largest divisor of S giving ~target-sized blocks, sublane-aligned, and
    (when possible) at least `min_steps` grid steps (keeps both v7x TCs busy)."""
    cands = [t for t in range(1, S + 1) if S % t == 0 and (t % 8 == 0 or t == S)]
    good = [t for t in cands if t * row_bytes <= target_bytes and S // t >= min_steps]
    if good:
        return max(good)
    ok_steps = [t for t in cands if S // t >= min_steps]
    return min(ok_steps) if ok_steps else S


# ----------------------------- wrapper -----------------------------------------

def positional_encoding_forward(x, pe, *, seq_tile=None):
    """x: (S, B, C) seq-first tokens; pe: (max_len, 1, C) buffer."""
    S, B, C = x.shape
    assert pe.shape[0] >= S and pe.shape[1] == 1 and pe.shape[2] == C

    itemsize = jnp.dtype(x.dtype).itemsize
    row_bytes = B * C * itemsize

    if seq_tile is None:
        seq_tile = _choose_seq_tile(S, row_bytes)
    assert S % seq_tile == 0 and (seq_tile % 8 == 0 or seq_tile == S)
    grid = (S // seq_tile,)

    # Lane-dense layouts: flatten (B, C) into the lane axis, drop pe's
    # singleton dim, and match pe's dtype to x's.
    x2 = x.reshape(S, B * C)
    pe2 = pe[:S, 0, :].astype(x.dtype)                        # (S, C)

    pe_bytes = S * C * itemsize
    pe_resident = pe_bytes <= (8 << 20)                       # keep small pe in VMEM once
    if pe_resident:
        pe_spec = pl.BlockSpec((S, C), lambda i: (0, 0))      # constant block -> one DMA
        pe_block_bytes = pe_bytes
    else:
        pe_spec = pl.BlockSpec((seq_tile, C), lambda i: (i, 0))
        pe_block_bytes = seq_tile * C * itemsize

    # Double-buffered x-in + double-buffered out + pe buffers + margin,
    # capped so it fits comfortably inside v7x's 64 MiB per-TC VMEM.
    block_bytes = seq_tile * B * C * itemsize
    vmem_need = 4 * block_bytes + 2 * pe_block_bytes + (2 << 20)
    vmem_limit = int(min(48 << 20, max(vmem_need, 16 << 20)))

    kernel = functools.partial(
        pe_add_kernel, seq_tile=seq_tile, batch=B, pe_resident=pe_resident)

    out2 = pl.pallas_call(
        kernel,
        grid=grid,
        in_specs=[
            pl.BlockSpec((seq_tile, B * C), lambda i: (i, 0)),   # token slab
            pe_spec,                                             # positional encodings
        ],
        out_specs=pl.BlockSpec((seq_tile, B * C), lambda i: (i, 0)),
        out_shape=jax.ShapeDtypeStruct((S, B * C), x.dtype),
        compiler_params=pltpu.CompilerParams(
            dimension_semantics=("parallel",),
            vmem_limit_bytes=vmem_limit,
        ),
    )(x2, pe2)

    return out2.reshape(S, B, C)


# ----------------------------- pe buffer (matches PyTorch exactly) --------------

def make_pe(max_len, d_model):
    assert d_model % 2 == 0, "even d_model required (as in the PyTorch module)"
    position = jnp.arange(max_len, dtype=jnp.float32)[:, None]          # (L, 1)
    div_term = jnp.exp(jnp.arange(0, d_model, 2, dtype=jnp.float32)
                       * (-math.log(10000.0) / d_model))                # (C/2,)
    pe = jnp.zeros((max_len, d_model), jnp.float32)
    pe = pe.at[:, 0::2].set(jnp.sin(position * div_term))
    pe = pe.at[:, 1::2].set(jnp.cos(position * div_term))
    # unsqueeze(0).transpose(0,1) -> (max_len, 1, d_model)
    return pe[:, None, :]


# ----------------------------- pure-JAX reference -------------------------------

def reference_forward(x, pe):
    S = x.shape[0]
    return x + pe[:S].astype(x.dtype)      # dropout(eval) == identity


# ----------------------------- demo / self-test ---------------------------------

if __name__ == "__main__":
    S, B, C = 64, 4, 128        # seq-first tokens, lane-dense channel dim
    max_len = 5000              # module default

    key = jax.random.PRNGKey(0)
    x = jax.random.normal(key, (S, B, C), jnp.float32)
    pe = make_pe(max_len, C)

    out = positional_encoding_forward(x, pe)       # auto seq_tile=32 -> grid=(2,)
    out = jax.block_until_ready(out)

    ref = jax.block_until_ready(reference_forward(x, pe))

    assert out.shape == (S, B, C)
    np.testing.assert_allclose(np.asarray(out), np.asarray(ref),
                               rtol=1e-6, atol=1e-6)
    print("KERNEL_OK")
</pallas_src>

<mosaic_0001>
module attributes {stable_mosaic.version = 11 : i64} {
  func.func @pe_add_kernel(%arg0: i32, %arg1: memref<32x512xf32, #tpu.memory_space<vmem>>, %arg2: memref<64x128xf32, #tpu.memory_space<vmem>>, %arg3: memref<32x512xf32, #tpu.memory_space<vmem>>) attributes {dimension_semantics = [#tpu.dimension_semantics<parallel>], iteration_bounds = array<i64: 2>, scalar_prefetch = 0 : i64, scratch_operands = 0 : i64, tpu.core_type = #tpu.core_type<tc>, window_params = [{transform_indices = @transform_0, window_bounds = array<i64: 32, 512>}, {pipeline_mode = #tpu.pipeline_mode<synchronous>, transform_indices = @transform_1, window_bounds = array<i64: 64, 128>}, {transform_indices = @transform_2, window_bounds = array<i64: 32, 512>}]} {
    %c32_i32 = arith.constant 32 : i32
    %0 = arith.muli %arg0, %c32_i32 : i32
    %1 = tpu.assume_multiple %0, 32 : i32
    %2 = arith.index_cast %1 : i32 to index
    %c0 = arith.constant 0 : index
    %3 = vector.load %arg2[%2, %c0] : memref<64x128xf32, #tpu.memory_space<vmem>>, vector<32x128xf32>
    %c0_0 = arith.constant 0 : index
    %c0_1 = arith.constant 0 : index
    %4 = vector.load %arg1[%c0_0, %c0_1] : memref<32x512xf32, #tpu.memory_space<vmem>>, vector<32x512xf32>
    %5 = tpu.concatenate %3, %3, %3, %3 in 1 : vector<32x128xf32>, vector<32x128xf32>, vector<32x128xf32>, vector<32x128xf32> -> vector<32x512xf32>
    %6 = arith.addf %4, %5 : vector<32x512xf32>
    %c0_2 = arith.constant 0 : index
    %c0_3 = arith.constant 0 : index
    %7 = vector.load %arg3[%c0_2, %c0_3] : memref<32x512xf32, #tpu.memory_space<vmem>>, vector<32x512xf32>
    tpu.vector_store %arg3[%c0_2, %c0_3], %6 {strides = array<i32>} : memref<32x512xf32, #tpu.memory_space<vmem>>, vector<32x512xf32>,
    return
  }
  func.func @transform_0(%arg0: i32) -> (i32, i32) {
    %c0_i32 = arith.constant 0 : i32
    %c0_i32_0 = arith.constant 0 : i32
    return %arg0, %c0_i32 : i32, i32
  }
  func.func @transform_1(%arg0: i32) -> (i32, i32) {
    %c0_i32 = arith.constant 0 : i32
    %c0_i32_0 = arith.constant 0 : i32
    %c0_i32_1 = arith.constant 0 : i32
    return %c0_i32, %c0_i32_0 : i32, i32
  }
  func.func @transform_2(%arg0: i32) -> (i32, i32) {
    %c0_i32 = arith.constant 0 : i32
    %c0_i32_0 = arith.constant 0 : i32
    return %arg0, %c0_i32 : i32, i32
  }
}

</mosaic_0001>

<llo_original>
// kernel: tpu_custom_call.1
$region0: #{tpu_custom_call.1}
  #allocation0 [shape = 'u32[]', space=smem, size = 0x4, offset = 0x4, fixed_abs, tag = 'smem constant byte address 0x4 - core index']
  #allocation1 [shape = 'u32[144,128]{1,0:T(1,128)}', space=vmem, size = 0x12000, scoped, tag = 'internal scratch']
  %s0 = inlined_call_operand.hbm [shape: f32[64,512], index: 0, kind: input, shape index: {}]
  %s1 = inlined_call_operand.hbm [shape: f32[64,128], index: 1, kind: input, shape index: {}]
  %s2 = inlined_call_operand.hbm [shape: f32[64,512], index: 2, kind: output, shape index: {}]
  %s3 = sld [smem:[#allocation0]]
  $region49: #{tpu_custom_call.1} parent=0
    _
  %s5 = ssub.s32 1, %s3
  %s6 = scalar_select 0, %s5, %s3
  $region1: #{tpu_custom_call.1} parent=0
    #allocation2 [shape = 'u8[131072]{0}', space=vmem, size = 0x20000, scoped, tag = 'input window, operand 0']
    #allocation3 [shape = 's32[2]{0}', space=sflag, size = 0x8, scoped, tag = 'scoped memory for tpu_custom_call.1']
    #allocation4 [shape = 's32[2]{0}', space=sflag, size = 0x8, scoped, tag = 'scoped memory for tpu_custom_call.1']
    #allocation5 [shape = 'u8[32768]{0}', space=vmem, size = 0x8000, scoped, tag = 'input window, operand 1, single buffered']
    #allocation6 [shape = 's32[1]{0}', space=sflag, size = 0x4, scoped, tag = 'scoped memory for tpu_custom_call.1']
    #allocation7 [shape = 'u8[131072]{0}', space=vmem, size = 0x20000, scoped, tag = 'output window, operand 0']
    %7 = vsyncpa [#allocation3], 0
    %s8 = scalar_lea.sflag [#allocation3], 1
    %9 = vsyncpa %s8, 0
    %10 = vsyncpa [#allocation6], 0
    %11 = vsyncpa [#allocation4], 0
    %s12 = scalar_lea.sflag [#allocation4], 1
    %13 = vsyncpa %s12, 0
    loop: start=0, step=1, limit=4
    $region2: #{tpu_custom_call.1} parent=1 // loop_pre_header
      _
    $region3: #{tpu_custom_call.1} parent=1 // loop_header
      %s15 = sphi 0, %s19
      %p16 = scmp.ge.s32.totalorder %s15, 4
      %s25 = sphi 0, %s27
      %s28 = sphi 0, %s25
      %s29 = sphi 0, %s28
      %s45 = sphi 0, %s29
      %s49 = sphi 0, %s49
      %s51 = sphi 0, %s49
      %s52 = sphi 0, %s51
      %s66 = sphi 0, %s52
      %s72 = sphi 0, %s74
      %s75 = sphi 0, %s72
      %s76 = sphi 0, %s75
      %s92 = sphi 0, %s76
    $region4: #{tpu_custom_call.1} parent=1 // loop_header_branch
      %18 = sbr.rel (%p16) target = $region8
    $region5: #{tpu_custom_call.1} parent=1 // loop_body
      %s20 = ssub.s32 %s15, 1
      %s21 = ssub.s32 %s15, 2
      %s22 = sadd.s32 %s15, 1
      %s23 = ssub.s32 %s15, %s22
      %p24 = scmp.eq.s32.totalorder %s23, 0
      %s26 = sadd.s32 %s25, 1
      %s27 = scalar_select %p24, %s25, %s26
      %p30 = pneg %p24
      %p31 = scmp.eq.s32.totalorder %s15, 1
      %p32 = por %p30, %p31
      %p33 = scmp.ne.s32.totalorder %s25, %s28
      %p34 = scmp.eq.s32.totalorder %s15, 0
      %p35 = por %p33, %p34
      %p36 = scmp.ne.s32.totalorder %s25, %s28
      %p37 = scmp.eq.s32.totalorder %s20, 1
      %p38 = por %p36, %p37
      %p39 = scmp.ne.s32.totalorder %s28, %s29
      %p40 = scmp.eq.s32.totalorder %s20, 0
      %p41 = por %p39, %p40
      %p42 = scmp.ne.s32.totalorder %s28, %s29
      %p43 = scmp.eq.s32.totalorder %s21, 1
      %p44 = por %p42, %p43
      %p46 = scmp.ne.s32.totalorder %s29, %s45
      %p47 = scmp.eq.s32.totalorder %s21, 0
      %p48 = por %p46, %p47
      %s50 = sadd.s32 %s49, 1
      %p53 = scmp.eq.s32.totalorder %s15, 1
      %p54 = scmp.ne.s32.totalorder %s49, %s51
      %p55 = scmp.eq.s32.totalorder %s15, 0
      %p56 = por %p54, %p55
      %p57 = scmp.ne.s32.totalorder %s49, %s51
      %p58 = scmp.eq.s32.totalorder %s20, 1
      %p59 = por %p57, %p58
      %p60 = scmp.ne.s32.totalorder %s51, %s52
      %p61 = scmp.eq.s32.totalorder %s20, 0
      %p62 = por %p60, %p61
      %p63 = scmp.ne.s32.totalorder %s51, %s52
      %p64 = scmp.eq.s32.totalorder %s21, 1
      %p65 = por %p63, %p64
      %p67 = scmp.ne.s32.totalorder %s52, %s66
      %p68 = scmp.eq.s32.totalorder %s21, 0
      %p69 = por %p67, %p68
      %s70 = ssub.s32 %s15, %s22
      %p71 = scmp.eq.s32.totalorder %s70, 0
      %s73 = sadd.s32 %s72, 1
      %s74 = scalar_select %p71, %s72, %s73
      %p77 = pneg %p71
      %p78 = scmp.eq.s32.totalorder %s15, 1
      %p79 = por %p77, %p78
      %p80 = scmp.ne.s32.totalorder %s72, %s75
      %p81 = scmp.eq.s32.totalorder %s15, 0
      %p82 = por %p80, %p81
      %p83 = scmp.ne.s32.totalorder %s72, %s75
      %p84 = scmp.eq.s32.totalorder %s20, 1
      %p85 = por %p83, %p84
      %p86 = scmp.ne.s32.totalorder %s75, %s76
      %p87 = scmp.eq.s32.totalorder %s20, 0
      %p88 = por %p86, %p87
      %p89 = scmp.ne.s32.totalorder %s75, %s76
      %p90 = scmp.eq.s32.totalorder %s21, 1
      %p91 = por %p89, %p90
      %p93 = scmp.ne.s32.totalorder %s76, %s92
      %p94 = scmp.eq.s32.totalorder %s21, 0
      %p95 = por %p93, %p94
      %p96 = scmp.le.s32.totalorder 1, %s15
      %p97 = scmp.lt.s32.totalorder %s15, 3
      %p98 = pnand %p96, %p97
      %p99 = pneg %p98
      // Predicated region
      $region9: #{tpu_custom_call.1} parent=5 // pred_check
        _
      $region10: #{tpu_custom_call.1} parent=5 // pred_check_branch
        %101 = sbr.rel (%p98) target = $region12
      $region11: #{tpu_custom_call.1} parent=5 // pred_region
        %s102 = ssub.s32 %s15, 1
        // Predicated region
        $region13: #{tpu_custom_call.1} parent=11 // pred_check
          %p103 = pneg %p62
        $region14: #{tpu_custom_call.1} parent=11 // pred_check_branch
          %105 = sbr.rel (%p103) target = $region16
        $region15: #{tpu_custom_call.1} parent=11 // pred_region
          %s107 = ssub.s32 1024, 1024
          %108 = vsyncadd [#allocation6], %s107
          %s109 = sshll.u32 [#allocation5], 4
          %s110 = int_to_ptr.vmem [resolvable:$true] %s109
          %115 = dma.hbm_to_vmem [thread:$0]  %s1, 1024, %s110, [#allocation6], 128, 128, 8
        $region16: #{tpu_custom_call.1} parent=11 // pred_fallthru
          _
      $region12: #{tpu_custom_call.1} parent=5 // pred_fallthru
        _
      %p116 = scmp.lt.s32.totalorder %s15, 2
      // Predicated region
      $region17: #{tpu_custom_call.1} parent=5 // pred_check
        %p117 = pneg %p116
      $region18: #{tpu_custom_call.1} parent=5 // pred_check_branch
        %119 = sbr.rel (%p117) target = $region20
      $region19: #{tpu_custom_call.1} parent=5 // pred_region
        // Predicated region
        $region21: #{tpu_custom_call.1} parent=19 // pred_check
          %p120 = pneg %p35
        $region22: #{tpu_custom_call.1} parent=19 // pred_check_branch
          %122 = sbr.rel (%p120) target = $region24
        $region23: #{tpu_custom_call.1} parent=19 // pred_region
          %s123 = sand.u32 %s25, 1
          %s124 = scalar_lea.sflag [#allocation3], %s123
          %s125 = sand.u32 %s25, 1
          %s126 = smul.addr %s125, 128
          %s127 = scalar_lea.vmem [#allocation2], %s126
          %s128 = smul.u32 4, %s15
          %s130 = ssub.s32 2048, 2048
          %131 = vsyncadd %s124, %s130
          %s132 = smul.addr %s128, 4
          %s133 = smul.addr %s132, 128
          %s134 = scalar_lea.hbm %s0, %s133
          %s135 = sshll.u32 %s127, 4
          %s136 = int_to_ptr.vmem [resolvable:$true] %s135
          %141 = dma.hbm_to_vmem [thread:$0]  %s134, 2048, %s136, %s124, 512, 512, 32
        $region24: #{tpu_custom_call.1} parent=19 // pred_fallthru
          _
      $region20: #{tpu_custom_call.1} parent=5 // pred_fallthru
        _
      %p142 = scmp.le.s32.totalorder 1, %s15
      %p143 = scmp.lt.s32.totalorder %s15, 3
      %p144 = pnand %p142, %p143
      %p145 = pneg %p144
      // Predicated region
      $region25: #{tpu_custom_call.1} parent=5 // pred_check
        _
      $region26: #{tpu_custom_call.1} parent=5 // pred_check_branch
        %147 = sbr.rel (%p144) target = $region28
      $region27: #{tpu_custom_call.1} parent=5 // pred_region
        %s148 = ssub.s32 %s15, 1
        %s149 = sand.u32 %s28, 1
        %s150 = scalar_lea.sflag [#allocation3], %s149
        %s151 = sand.u32 %s28, 1
        %s152 = smul.addr %s151, 128
        %s153 = scalar_lea.vmem [#allocation2], %s152
        // Predicated region
        $region29: #{tpu_custom_call.1} parent=27 // pred_check
          %p154 = pneg %p41
        $region30: #{tpu_custom_call.1} parent=27 // pred_check_branch
          %156 = sbr.rel (%p154) target = $region32
        $region31: #{tpu_custom_call.1} parent=27 // pred_region
          %157 = dma.done %s150, 2048
        $region32: #{tpu_custom_call.1} parent=27 // pred_fallthru
          _
        // Predicated region
        $region33: #{tpu_custom_call.1} parent=27 // pred_check
          %p158 = pneg %p62
        $region34: #{tpu_custom_call.1} parent=27 // pred_check_branch
          %160 = sbr.rel (%p158) target = $region36
        $region35: #{tpu_custom_call.1} parent=27 // pred_region
          %161 = dma.done [#allocation6], 1024
        $region36: #{tpu_custom_call.1} parent=27 // pred_fallthru
          _
        %s162 = sand.u32 %s28, 1
        %s163 = scalar_lea.sflag [#allocation3], %s162
        %s164 = sand.u32 %s28, 1
        %s165 = smul.addr %s164, 128
        %s166 = scalar_lea.vmem [#allocation2], %s165
        %p167 = pneg %p41
        %p168 = pneg %p38
        %p169 = pneg %p62
        %p170 = pneg %p59
        %p171 = pneg %p88
        %p172 = pneg %p85
        %s173 = sand.u32 %s75, 1
        %s174 = scalar_lea.sflag [#allocation4], %s173
        %s175 = sand.u32 %s75, 1
        %s176 = smul.addr %s175, 128
        %s177 = scalar_lea.vmem [#allocation7], %s176
        %s178 = smul.u32 4, %s20
        %s179 = smul.u32 4, %s20
        %s180 = smul.u32 %s20, 32
        %s181 = scalar_lea.vmem [#allocation5], %s180
        %v182 = vld [vmem:[%s181] sm:$0xff]
        %v183 = vld [vmem:[%s181 + $0x8] sm:$0xff]
        %v184 = vld [vmem:[%s181 + $0x10] sm:$0xff]
        %v185 = vld [vmem:[%s181 + $0x18] sm:$0xff]
        %v186 = vld [vmem:[%s153] sm:$0xff]
        %v187 = vld [vmem:[%s153 + $0x8] sm:$0xff]
        %v188 = vld [vmem:[%s153 + $0x10] sm:$0xff]
        %v189 = vld [vmem:[%s153 + $0x18] sm:$0xff]
        %v190 = vld [vmem:[%s153 + $0x20] sm:$0xff]
        %v191 = vld [vmem:[%s153 + $0x28] sm:$0xff]
        %v192 = vld [vmem:[%s153 + $0x30] sm:$0xff]
        %v193 = vld [vmem:[%s153 + $0x38] sm:$0xff]
        %v194 = vld [vmem:[%s153 + $0x40] sm:$0xff]
        %v195 = vld [vmem:[%s153 + $0x48] sm:$0xff]
        %v196 = vld [vmem:[%s153 + $0x50] sm:$0xff]
        %v197 = vld [vmem:[%s153 + $0x58] sm:$0xff]
        %v198 = vld [vmem:[%s153 + $0x60] sm:$0xff]
        %v199 = vld [vmem:[%s153 + $0x68] sm:$0xff]
        %v200 = vld [vmem:[%s153 + $0x70] sm:$0xff]
        %v201 = vld [vmem:[%s153 + $0x78] sm:$0xff]
        %v202 = vadd.f32 %v186, %v182
        %v203 = vadd.f32 %v187, %v182
        %v204 = vadd.f32 %v188, %v182
        %v205 = vadd.f32 %v189, %v182
        %v206 = vadd.f32 %v190, %v183
        %v207 = vadd.f32 %v191, %v183
        %v208 = vadd.f32 %v192, %v183
        %v209 = vadd.f32 %v193, %v183
        %v210 = vadd.f32 %v194, %v184
        %v211 = vadd.f32 %v195, %v184
        %v212 = vadd.f32 %v196, %v184
        %v213 = vadd.f32 %v197, %v184
        %v214 = vadd.f32 %v198, %v185
        %v215 = vadd.f32 %v199, %v185
        %v216 = vadd.f32 %v200, %v185
        %v217 = vadd.f32 %v201, %v185
        %218 = vst [vmem:[%s177] sm:$0xff] %v202
        %219 = vst [vmem:[%s177 + $0x8] sm:$0xff] %v203
        %220 = vst [vmem:[%s177 + $0x10] sm:$0xff] %v204
        %221 = vst [vmem:[%s177 + $0x18] sm:$0xff] %v205
        %222 = vst [vmem:[%s177 + $0x20] sm:$0xff] %v206
        %223 = vst [vmem:[%s177 + $0x28] sm:$0xff] %v207
        %224 = vst [vmem:[%s177 + $0x30] sm:$0xff] %v208
        %225 = vst [vmem:[%s177 + $0x38] sm:$0xff] %v209
        %226 = vst [vmem:[%s177 + $0x40] sm:$0xff] %v210
        %227 = vst [vmem:[%s177 + $0x48] sm:$0xff] %v211
        %228 = vst [vmem:[%s177 + $0x50] sm:$0xff] %v212
        %229 = vst [vmem:[%s177 + $0x58] sm:$0xff] %v213
        %230 = vst [vmem:[%s177 + $0x60] sm:$0xff] %v214
        %231 = vst [vmem:[%s177 + $0x68] sm:$0xff] %v215
        %232 = vst [vmem:[%s177 + $0x70] sm:$0xff] %v216
        %233 = vst [vmem:[%s177 + $0x78] sm:$0xff] %v217
        %s234 = sand.u32 %s75, 1
        %s235 = scalar_lea.sflag [#allocation4], %s234
        %s236 = sand.u32 %s75, 1
        %s237 = smul.addr %s236, 128
        %s238 = scalar_lea.vmem [#allocation7], %s237
        // Predicated region
        $region37: #{tpu_custom_call.1} parent=27 // pred_check
          %p239 = pneg %p85
        $region38: #{tpu_custom_call.1} parent=27 // pred_check_branch
          %241 = sbr.rel (%p239) target = $region40
        $region39: #{tpu_custom_call.1} parent=27 // pred_region
          %s242 = smul.u32 4, %s20
          %s244 = ssub.s32 2048, 2048
          %245 = vsyncadd %s235, %s244
          %s246 = smul.addr %s242, 4
          %s247 = smul.addr %s246, 128
          %s248 = scalar_lea.hbm %s2, %s247
          %s249 = sshll.u32 %s238, 4
          %s250 = int_to_ptr.vmem [resolvable:$true] %s249
          %255 = dma.vmem_to_hbm [thread:$0]  %s250, 2048, %s248, %s235, 512, 512, 32
        $region40: #{tpu_custom_call.1} parent=27 // pred_fallthru
          _
      $region28: #{tpu_custom_call.1} parent=5 // pred_fallthru
        _
      %p256 = scmp.le.s32.totalorder 2, %s15
      // Predicated region
      $region41: #{tpu_custom_call.1} parent=5 // pred_check
        %p257 = pneg %p256
      $region42: #{tpu_custom_call.1} parent=5 // pred_check_branch
        %259 = sbr.rel (%p257) target = $region44
      $region43: #{tpu_custom_call.1} parent=5 // pred_region
        %s260 = ssub.s32 %s15, 2
        // Predicated region
        $region45: #{tpu_custom_call.1} parent=43 // pred_check
          %p261 = pneg %p91
        $region46: #{tpu_custom_call.1} parent=43 // pred_check_branch
          %263 = sbr.rel (%p261) target = $region48
        $region47: #{tpu_custom_call.1} parent=43 // pred_region
          %s264 = sand.u32 %s76, 1
          %s265 = scalar_lea.sflag [#allocation4], %s264
          %s266 = sand.u32 %s76, 1
          %s267 = smul.addr %s266, 128
          %s268 = scalar_lea.vmem [#allocation7], %s267
          %269 = dma.done %s265, 2048
        $region48: #{tpu_custom_call.1} parent=43 // pred_fallthru
          _
      $region44: #{tpu_custom_call.1} parent=5 // pred_fallthru
        _
    $region6: #{tpu_custom_call.1} parent=1 // loop_footer
      %s19 = sadd.s32 1, %s15
    $region7: #{tpu_custom_call.1} parent=1 // loop_footer_branch
      %14 = sbr.rel target = $region3
    $region8: #{tpu_custom_call.1} parent=1 // loop_exit
      _
    %270 = vsyncpa [#allocation3], 1
    %s271 = scalar_lea.sflag [#allocation3], 1
    %272 = vsyncpa %s271, 1
    %273 = vsyncpa [#allocation6], 1
    %274 = vsyncpa [#allocation4], 1
    %s275 = scalar_lea.sflag [#allocation4], 1
    %276 = vsyncpa %s275, 1

</llo_original>
